<compile_context>
chip_gen: v7x
topology: tpu7x:2x2x1
jax: 0.10.0
libtpu: 0.0.40
codegen_flags: <defaults>
</compile_context>

<pallas_src>
import jax
import jax.numpy as jnp
from jax.experimental import pallas as pl
from jax.experimental.pallas import tpu as pltpu


def _round_up(x, m):
    return ((x + m - 1) // m) * m


def nci_classifier_kernel(x_ref, w_ref, b_ref, o_ref):
    # In-kernel cast of x to the weight's compute dtype (VPU filler hidden
    # under the x DMA; keeps x f32 in HBM).
    x = x_ref[...].astype(w_ref.dtype)
    # MXU matmul with f32 accumulation.
    z = jnp.dot(x, w_ref[...], preferred_element_type=jnp.float32)
    # Bias add (VPU) + sigmoid (EUP) in f32.
    z = z + b_ref[...]                       # (TM, C) + (1, C)
    o_ref[...] = jax.nn.sigmoid(z).astype(o_ref.dtype)


def prepare_nci_params(weight, bias, *, compute_dtype=jnp.bfloat16):
    """One-time parameter formatting, hoisted out of the per-call hot path.

    weight: (E, C) -- transpose of torch nn.Linear.weight
    bias:   (C,)
    Use compute_dtype=jnp.float32 as a precision escape hatch for very large E.
    """
    E, C = weight.shape
    assert bias.shape == (C,)
    return weight.astype(compute_dtype), bias.astype(jnp.float32).reshape(1, C)


def nci_classifier(x, weight, bias, *, block_m=512, out_dtype=jnp.float32,
                   xla_below=0):
    """Forward pass of NCIClassifier: sigmoid(x @ weight + bias).

    xla_below: if B*E*C is below this threshold, dispatch to plain fused XLA
               instead of the Pallas path (0 = always use the Pallas kernel).
    """
    leading = x.shape[:-1]
    E = x.shape[-1]
    E2, C = weight.shape
    assert E == E2, "weight must be (embedding_dim, num_classes)"
    if bias.ndim == 1:
        bias = bias.reshape(1, C)
    bias = bias.astype(jnp.float32)

    x2 = x.reshape(-1, E)
    B = x2.shape[0]

    if B * E * C < xla_below:
        # Tiny-problem fallback: XLA's fused dot+sigmoid beats kernel dispatch.
        z = jnp.dot(x2.astype(weight.dtype), weight,
                    preferred_element_type=jnp.float32) + bias
        return jax.nn.sigmoid(z).astype(out_dtype).reshape(*leading, C)

    # Batch tile: sublane-aligned and large so per-grid-step pipeline overhead
    # is amortized. No HBM padding anywhere: full last dims (E, C) are exempt
    # from the (8,128) rule; ragged final batch blocks are masked on store.
    TM = min(block_m, _round_up(B, 8))
    num_steps = pl.cdiv(B, TM)
    # v7x has 2 TensorCores: prefer >=2 balanced "parallel" steps for
    # mid-sized batches so both cores get work (no effect on v5e/v6e).
    if num_steps == 1 and B > 128:
        TM = _round_up(pl.cdiv(B, 2), 8)
        num_steps = pl.cdiv(B, TM)

    cost = pl.CostEstimate(
        flops=2 * B * E * C,
        transcendentals=B * C,
        bytes_accessed=(B * E * x.dtype.itemsize                 # x read
                        + E * C * weight.dtype.itemsize          # weight read
                        + C * 4                                  # bias read
                        + B * C * jnp.dtype(out_dtype).itemsize  # out write
                        ),
    )

    out = pl.pallas_call(
        nci_classifier_kernel,
        out_shape=jax.ShapeDtypeStruct((B, C), out_dtype),
        grid_spec=pl.GridSpec(
            grid=(num_steps,),
            in_specs=[
                pl.BlockSpec((TM, E), lambda i: (i, 0)),   # x tile, pipelined over batch
                pl.BlockSpec((E, C), lambda i: (0, 0)),    # weight, grid-invariant
                pl.BlockSpec((1, C), lambda i: (0, 0)),    # bias, grid-invariant
            ],
            out_specs=pl.BlockSpec((TM, C), lambda i: (i, 0)),
        ),
        compiler_params=pltpu.CompilerParams(
            dimension_semantics=("parallel",),             # megacore / 2-TC sharding
        ),
        cost_estimate=cost,
    )(x2, weight, bias)

    return out.reshape(*leading, C)


if __name__ == "__main__":
    # Shapes consistent with NCIClassifier(embedding_dim, num_classes).
    batch, embedding_dim, num_classes = 8, 32, 16

    key = jax.random.PRNGKey(0)
    kx, kw, kb, kx2 = jax.random.split(key, 4)

    x = jax.random.normal(kx, (batch, embedding_dim), dtype=jnp.float32)
    # Parameters stored pre-transposed relative to torch: (embedding_dim, num_classes).
    weight = jax.random.normal(kw, (embedding_dim, num_classes), dtype=jnp.float32) * 0.1
    bias = jax.random.normal(kb, (num_classes,), dtype=jnp.float32) * 0.1

    # One-time parameter formatting (bf16 weight, (1, C) f32 bias).
    w_c, b_c = prepare_nci_params(weight, bias)

    out = jax.block_until_ready(nci_classifier(x, w_c, b_c))
    ref = jax.nn.sigmoid(x @ weight + bias)
    assert out.shape == (batch, num_classes)
    # bf16 operands + f32 accumulation: loose-but-safe tolerance vs. f32 reference.
    assert jnp.allclose(out, ref, atol=1e-2, rtol=1e-2), "mismatch vs f32 reference"

    # Second check: multi-step "parallel" batch grid with a ragged final block
    # (no HBM padding / slicing anywhere).
    big_batch = 300
    xb = jax.random.normal(kx2, (big_batch, embedding_dim), dtype=jnp.float32)
    out_b = jax.block_until_ready(nci_classifier(xb, w_c, b_c))
    ref_b = jax.nn.sigmoid(xb @ weight + bias)
    assert out_b.shape == (big_batch, num_classes)
    assert jnp.allclose(out_b, ref_b, atol=1e-2, rtol=1e-2), "mismatch on batched grid"

    print("KERNEL_OK")
</pallas_src>

<mosaic_0001>
module attributes {stable_mosaic.version = 11 : i64} {
  func.func @nci_classifier_kernel(%arg0: i32, %arg1: memref<8x32xf32, #tpu.memory_space<vmem>>, %arg2: memref<32x16xbf16, #tpu.memory_space<vmem>>, %arg3: memref<1x16xf32, #tpu.memory_space<vmem>>, %arg4: memref<8x16xf32, #tpu.memory_space<vmem>>) attributes {dimension_semantics = [#tpu.dimension_semantics<parallel>], iteration_bounds = array<i64: 1>, scalar_prefetch = 0 : i64, scratch_operands = 0 : i64, tpu.core_type = #tpu.core_type<tc>, window_params = [{transform_indices = @transform_0, window_bounds = array<i64: 8, 32>}, {pipeline_mode = #tpu.pipeline_mode<synchronous>, transform_indices = @transform_1, window_bounds = array<i64: 32, 16>}, {pipeline_mode = #tpu.pipeline_mode<synchronous>, transform_indices = @transform_2, window_bounds = array<i64: 1, 16>}, {transform_indices = @transform_3, window_bounds = array<i64: 8, 16>}]} {
    %c0 = arith.constant 0 : index
    %c0_0 = arith.constant 0 : index
    %0 = vector.load %arg1[%c0, %c0_0] : memref<8x32xf32, #tpu.memory_space<vmem>>, vector<8x32xf32>
    %1 = arith.truncf %0 : vector<8x32xf32> to vector<8x32xbf16>
    %c0_1 = arith.constant 0 : index
    %c0_2 = arith.constant 0 : index
    %2 = vector.load %arg2[%c0_1, %c0_2] : memref<32x16xbf16, #tpu.memory_space<vmem>>, vector<32x16xbf16>
    %cst = arith.constant dense<0.000000e+00> : vector<8x16xf32>
    %3 = tpu.matmul %1, %2, %cst {dimension_numbers = #tpu.dot_dimension_numbers<[1], [0], [0], [1], [0, 0, 1, 1], [], []>} : vector<8x32xbf16>, vector<32x16xbf16>, vector<8x16xf32> -> vector<8x16xf32>
    %c0_3 = arith.constant 0 : index
    %c0_4 = arith.constant 0 : index
    %4 = vector.load %arg3[%c0_3, %c0_4] : memref<1x16xf32, #tpu.memory_space<vmem>>, vector<1x16xf32>
    %5 = vector.broadcast %4 : vector<1x16xf32> to vector<8x16xf32>
    %6 = arith.addf %3, %5 : vector<8x16xf32>
    %7 = arith.negf %6 : vector<8x16xf32>
    %8 = math.exp %7 : vector<8x16xf32>
    %cst_5 = arith.constant 1.000000e+00 : f32
    %9 = vector.broadcast %cst_5 : f32 to vector<8x16xf32>
    %10 = arith.addf %9, %8 : vector<8x16xf32>
    %11 = arith.divf %9, %10 : vector<8x16xf32>
    %c0_6 = arith.constant 0 : index
    %c0_7 = arith.constant 0 : index
    %12 = vector.load %arg4[%c0_6, %c0_7] : memref<8x16xf32, #tpu.memory_space<vmem>>, vector<8x16xf32>
    tpu.vector_store %arg4[%c0_6, %c0_7], %11 {strides = array<i32>} : memref<8x16xf32, #tpu.memory_space<vmem>>, vector<8x16xf32>,
    return
  }
  func.func @transform_0(%arg0: i32) -> (i32, i32) {
    %c0_i32 = arith.constant 0 : i32
    %c0_i32_0 = arith.constant 0 : i32
    return %arg0, %c0_i32 : i32, i32
  }
  func.func @transform_1(%arg0: i32) -> (i32, i32) {
    %c0_i32 = arith.constant 0 : i32
    %c0_i32_0 = arith.constant 0 : i32
    %c0_i32_1 = arith.constant 0 : i32
    return %c0_i32, %c0_i32_0 : i32, i32
  }
  func.func @transform_2(%arg0: i32) -> (i32, i32) {
    %c0_i32 = arith.constant 0 : i32
    %c0_i32_0 = arith.constant 0 : i32
    %c0_i32_1 = arith.constant 0 : i32
    return %c0_i32, %c0_i32_0 : i32, i32
  }
  func.func @transform_3(%arg0: i32) -> (i32, i32) {
    %c0_i32 = arith.constant 0 : i32
    %c0_i32_0 = arith.constant 0 : i32
    return %arg0, %c0_i32 : i32, i32
  }
}

</mosaic_0001>

<llo_original>
// kernel: tpu_custom_call.1
$region0: #{tpu_custom_call.1}
  #allocation0 [shape = 'u32[]', space=smem, size = 0x4, offset = 0x4, fixed_abs, tag = 'smem constant byte address 0x4 - core index']
  #allocation1 [shape = 'u32[144,128]{1,0:T(1,128)}', space=vmem, size = 0x12000, scoped, tag = 'internal scratch']
  %s0 = inlined_call_operand.vmem [shape: f32[8,32], index: 0, kind: input, shape index: {}]
  %s1 = inlined_call_operand.vmem [shape: bf16[32,16], index: 1, kind: input, shape index: {}]
  %s2 = inlined_call_operand.vmem [shape: f32[1,16], index: 2, kind: input, shape index: {}]
  %s3 = inlined_call_operand.hbm [shape: f32[8,16], index: 3, kind: output, shape index: {}]
  %s4 = sld [smem:[#allocation0]]
  $region22: #{tpu_custom_call.1} parent=0
    _
  %s6 = ssub.s32 1, %s4
  %s7 = scalar_select 0, %s6, %s4
  $region1: #{tpu_custom_call.1} parent=0
    #allocation2 [shape = 'u8[4096]{0}', space=vmem, size = 0x1000, scoped, tag = 'output window, operand 0, single buffered']
    #allocation3 [shape = 's32[1]{0}', space=sflag, size = 0x4, scoped, tag = 'scoped memory for tpu_custom_call.1']
    %8 = vsyncpa [#allocation3], 0
    // Predicated region
    $region2: #{tpu_custom_call.1} parent=1 // pred_check
      _
    $region3: #{tpu_custom_call.1} parent=1 // pred_check_branch
      %10 = sbr.rel (0) target = $region5
    $region4: #{tpu_custom_call.1} parent=1 // pred_region
      _
    $region5: #{tpu_custom_call.1} parent=1 // pred_fallthru
      _
    // Predicated region
    $region6: #{tpu_custom_call.1} parent=1 // pred_check
      _
    $region7: #{tpu_custom_call.1} parent=1 // pred_check_branch
      %12 = sbr.rel (0) target = $region9
    $region8: #{tpu_custom_call.1} parent=1 // pred_region
      _
    $region9: #{tpu_custom_call.1} parent=1 // pred_fallthru
      _
    // Predicated region
    $region10: #{tpu_custom_call.1} parent=1 // pred_check
      _
    $region11: #{tpu_custom_call.1} parent=1 // pred_check_branch
      %14 = sbr.rel (0) target = $region13
    $region12: #{tpu_custom_call.1} parent=1 // pred_region
      _
    $region13: #{tpu_custom_call.1} parent=1 // pred_fallthru
      _
    %v16 = vld [vmem:[%s0] sm:$0xff]
    %v17 = vpack.c.bf16 %v16, %v16
    %v18 = vld [vmem:[%s1] sm:$0xf]
    %v19 = vld [vmem:[%s1 + $0x4] sm:$0xf]
    %v20 = vld [vmem:[%s1 + $0x8] sm:$0xf]
    %v21 = vld [vmem:[%s1 + $0xc] sm:$0xf]
    %v22 = vld [vmem:[%s2] sm:$0x1]
    %v24 = vlaneseq
    %v25 = vshrl.u32 %v24, 7
    %v26 = vsub.s32 0, %v25
    %v27 = vrot.slane %v22, %v26
    %v33 = vunpack.c.l.b16 %v18
    %v34 = vunpack.c.l.b16 %v19
    %v35 = vunpack.c.l.b16 %v20
    %v36 = vunpack.c.l.b16 %v21
    %v37 = vpack.c.b16 %v34, %v33
    %v38 = vpack.c.b16 %v36, %v35
    %vm41 = vcmask 261120
    %v43 = vsel %vm41, %v17, 0
    %45 = vmatprep.subr.bf16.mxu0 0
    %46 = vmatpush1.bf16.msra.mxu0 %v37
    %47 = vmatprep.subr.bf16.mxu0 0
    %48 = vmatpush1.bf16.msra.mxu0 %v38
    %49 = vmatprep.subr.bf16.mxu0 0
    %50 = vmatpush1.bf16.msra.mxu0 0
    %51 = vmatprep.subr.bf16.mxu0 0
    %52 = vmatpush1.bf16.msra.mxu0 0
    %53 = vmatprep.subr.bf16.mxu0 0
    %54 = vmatpush1.bf16.msra.mxu0 0
    %55 = vmatprep.subr.bf16.mxu0 0
    %56 = vmatpush1.bf16.msra.mxu0 0
    %57 = vmatprep.subr.bf16.mxu0 0
    %58 = vmatpush1.bf16.msra.mxu0 0
    %59 = vmatprep.subr.bf16.mxu0 0
    %60 = vmatpush1.bf16.msra.mxu0 0
    %61 = vmatprep.subr.bf16.mxu0 0
    %62 = vmatpush1.bf16.msra.mxu0 0
    %63 = vmatprep.subr.bf16.mxu0 0
    %64 = vmatpush1.bf16.msra.mxu0 0
    %65 = vmatprep.subr.bf16.mxu0 0
    %66 = vmatpush1.bf16.msra.mxu0 0
    %67 = vmatprep.subr.bf16.mxu0 0
    %68 = vmatpush1.bf16.msra.mxu0 0
    %69 = vmatprep.subr.bf16.mxu0 0
    %70 = vmatpush1.bf16.msra.mxu0 0
    %71 = vmatprep.subr.bf16.mxu0 0
    %72 = vmatpush1.bf16.msra.mxu0 0
    %73 = vmatprep.subr.bf16.mxu0 0
    %74 = vmatpush1.bf16.msra.mxu0 0
    %75 = vmatprep.subr.bf16.mxu0 0
    %76 = vmatpush1.bf16.msra.mxu0 0
    %77 = vmatprep.mubr.bf16.mxu0 0
    %78 = vmatmul.mubr.bf16.gmra.mrb[0].mxu0 %v43
    %v79 = vpop.f32.mrb[0].mxu0
    %v80 = vadd.f32 %v27, %v79
    %v81 = vpop.f32.mrb[0].mxu0
    %v82 = vpop.f32.mrb[0].mxu0
    %v83 = vpop.f32.mrb[0].mxu0
    %84 = vdwg.mxu0
    %v85 = vxor.u32 %v80, 2147483648
    %v86 = vmul.f32 %v85, 1.442695
    %v87 = vpow.pop %v86
    %v88 = vadd.f32 %v87, 1.0
    %v89 = vrcp.pop %v88
    %v90 = vmul.f32 1.0, %v89
    %vm91 = vcmask 130048
    %92 = vst.msk [vmem:[#allocation2] sm:$0xff] %vm91, %v90
    // Predicated region
    $region14: #{tpu_custom_call.1} parent=1 // pred_check
      _
    $region15: #{tpu_custom_call.1} parent=1 // pred_check_branch
      %94 = sbr.rel (0) target = $region17
    $region16: #{tpu_custom_call.1} parent=1 // pred_region
      %s96 = ssub.s32 128, 128
      %97 = vsyncadd [#allocation3], %s96
      %s99 = sshll.u32 [#allocation2], 4
      %s100 = int_to_ptr.vmem [resolvable:$true] %s99
      %102 = dma.vmem_to_hbm [thread:$0]  %s100, 128, %s3, [#allocation3]
    $region17: #{tpu_custom_call.1} parent=1 // pred_fallthru
      _
    // Predicated region
    $region18: #{tpu_custom_call.1} parent=1 // pred_check
      _
    $region19: #{tpu_custom_call.1} parent=1 // pred_check_branch
      %104 = sbr.rel (0) target = $region21
    $region20: #{tpu_custom_call.1} parent=1 // pred_region
      %105 = dma.done [#allocation3], 128
    $region21: #{tpu_custom_call.1} parent=1 // pred_fallthru
      _
    %106 = vsyncpa [#allocation3], 1

</llo_original>
